<compile_context>
chip_gen: v7x
topology: tpu7x:2x2x1
jax: 0.10.0
libtpu: 0.0.40
codegen_flags: <defaults>
</compile_context>

<pallas_src>
import jax
import jax.numpy as jnp
from jax.experimental import pallas as pl
from jax.experimental.pallas import tpu as pltpu

INPUT_SIZE = 30
HIDDEN_SIZE = 30
OUTPUT_SIZE = 2

LANE = 128          # lane width: pad HIDDEN/OUTPUT to this
TB_MAX = 512        # max batch-tile rows (multiple of 8), VMEM-safe on v7x


def _round_up(n, m):
    return pl.cdiv(n, m) * m


def _mlp_kernel(x_ref, w1_ref, b1_ref, w2_ref, b2_ref, o_ref):
    # fc1: (TB, IN) bf16 @ (IN, HID_P) bf16 -> f32 accumulator
    h = jnp.dot(x_ref[...], w1_ref[...], preferred_element_type=jnp.float32)
    # bias + ReLU in f32 on the accumulator (padded lanes stay exactly 0)
    h = jnp.maximum(h + b1_ref[...], 0.0)
    # fc2: (TB, HID_P) bf16 @ (HID_P, OUT_P) bf16 -> f32 accumulator
    y = jnp.dot(h.astype(w2_ref.dtype), w2_ref[...],
                preferred_element_type=jnp.float32)
    o_ref[...] = (y + b2_ref[...]).astype(o_ref.dtype)


def neural_net_forward(x, w1, b1, w2, b2):
    """x: (B, IN) f32; w1: (IN, HID); b1: (HID,); w2: (HID, OUT); b2: (OUT,).

    Weights are stored transposed vs PyTorch (nn.Linear keeps (out, in)), so the
    math y = relu(x @ W1 + b1) @ W2 + b2 is identical to the module's forward.
    """
    B, in_dim = x.shape
    hid = w1.shape[1]
    out_dim = w2.shape[1]
    hid_p = _round_up(hid, LANE)
    out_p = _round_up(out_dim, LANE)

    # --- one-time lane padding + bf16 cast of MXU operands -------------------
    w1_p = jnp.zeros((in_dim, hid_p), jnp.bfloat16).at[:, :hid].set(
        w1.astype(jnp.bfloat16))
    b1_p = jnp.zeros((1, hid_p), jnp.float32).at[:, :hid].set(b1)
    w2_p = jnp.zeros((hid_p, out_p), jnp.bfloat16).at[:hid, :out_dim].set(
        w2.astype(jnp.bfloat16))
    b2_p = jnp.zeros((1, out_p), jnp.float32).at[:, :out_dim].set(b2)

    # --- batch tiling ---------------------------------------------------------
    tb = min(TB_MAX, _round_up(B, 8))        # multiple of 8 sublanes
    b_pad = _round_up(B, tb)
    x_p = x.astype(jnp.bfloat16)
    if b_pad != B:
        x_p = jnp.pad(x_p, ((0, b_pad - B), (0, 0)))

    y = pl.pallas_call(
        _mlp_kernel,
        out_shape=jax.ShapeDtypeStruct((b_pad, out_p), jnp.float32),
        grid=(b_pad // tb,),
        in_specs=[
            pl.BlockSpec((tb, in_dim), lambda i: (i, 0)),       # x tile
            pl.BlockSpec((in_dim, hid_p), lambda i: (0, 0)),    # W1 (resident)
            pl.BlockSpec((1, hid_p), lambda i: (0, 0)),         # b1 (resident)
            pl.BlockSpec((hid_p, out_p), lambda i: (0, 0)),     # W2 (resident)
            pl.BlockSpec((1, out_p), lambda i: (0, 0)),         # b2 (resident)
        ],
        out_specs=pl.BlockSpec((tb, out_p), lambda i: (i, 0)),
        compiler_params=pltpu.CompilerParams(
            dimension_semantics=("parallel",),
        ),
    )(x_p, w1_p, b1_p, w2_p, b2_p)

    return y[:B, :out_dim]


def init_params(key):
    """Deterministic init mimicking nn.Linear's uniform(-1/sqrt(fan_in), ...)."""
    k1, k2, k3, k4 = jax.random.split(key, 4)
    bound1 = 1.0 / (INPUT_SIZE ** 0.5)
    bound2 = 1.0 / (HIDDEN_SIZE ** 0.5)
    w1 = jax.random.uniform(k1, (INPUT_SIZE, HIDDEN_SIZE), jnp.float32,
                            minval=-bound1, maxval=bound1)
    b1 = jax.random.uniform(k2, (HIDDEN_SIZE,), jnp.float32,
                            minval=-bound1, maxval=bound1)
    w2 = jax.random.uniform(k3, (HIDDEN_SIZE, OUTPUT_SIZE), jnp.float32,
                            minval=-bound2, maxval=bound2)
    b2 = jax.random.uniform(k4, (OUTPUT_SIZE,), jnp.float32,
                            minval=-bound2, maxval=bound2)
    return w1, b1, w2, b2


if __name__ == "__main__":
    key = jax.random.PRNGKey(0)
    w1, b1, w2, b2 = init_params(key)

    # Input consistent with the module: x = np.linspace(0, 1, 30) feature
    # vectors; use a small batch of 8.
    B = 8
    base = jnp.linspace(0.0, 1.0, INPUT_SIZE, dtype=jnp.float32)
    x = jnp.stack([base + 0.01 * i for i in range(B)], axis=0)  # (8, 30)

    out = neural_net_forward(x, w1, b1, w2, b2)
    out = jax.block_until_ready(out)
    assert out.shape == (B, OUTPUT_SIZE)

    # Reference mirroring the kernel's bf16-operand / f32-accumulate math.
    xb = x.astype(jnp.bfloat16).astype(jnp.float32)
    w1b = w1.astype(jnp.bfloat16).astype(jnp.float32)
    w2b = w2.astype(jnp.bfloat16).astype(jnp.float32)
    h_ref = jnp.maximum(xb @ w1b + b1, 0.0)
    ref = h_ref.astype(jnp.bfloat16).astype(jnp.float32) @ w2b + b2
    assert jnp.allclose(out, ref, atol=1e-4, rtol=1e-4)

    # Sanity check against the pure-f32 module semantics (bf16-level tolerance).
    ref_f32 = jnp.maximum(x @ w1 + b1, 0.0) @ w2 + b2
    assert jnp.allclose(out, ref_f32, atol=3e-2, rtol=3e-2)

    print("KERNEL_OK")
</pallas_src>

<mosaic_0001>
module attributes {stable_mosaic.version = 11 : i64} {
  func.func @_mlp_kernel(%arg0: i32, %arg1: memref<8x30xbf16, #tpu.memory_space<vmem>>, %arg2: memref<30x128xbf16, #tpu.memory_space<vmem>>, %arg3: memref<1x128xf32, #tpu.memory_space<vmem>>, %arg4: memref<128x128xbf16, #tpu.memory_space<vmem>>, %arg5: memref<1x128xf32, #tpu.memory_space<vmem>>, %arg6: memref<8x128xf32, #tpu.memory_space<vmem>>) attributes {dimension_semantics = [#tpu.dimension_semantics<parallel>], iteration_bounds = array<i64: 1>, scalar_prefetch = 0 : i64, scratch_operands = 0 : i64, tpu.core_type = #tpu.core_type<tc>, window_params = [{transform_indices = @transform_0, window_bounds = array<i64: 8, 30>}, {pipeline_mode = #tpu.pipeline_mode<synchronous>, transform_indices = @transform_1, window_bounds = array<i64: 30, 128>}, {pipeline_mode = #tpu.pipeline_mode<synchronous>, transform_indices = @transform_2, window_bounds = array<i64: 1, 128>}, {pipeline_mode = #tpu.pipeline_mode<synchronous>, transform_indices = @transform_3, window_bounds = array<i64: 128, 128>}, {pipeline_mode = #tpu.pipeline_mode<synchronous>, transform_indices = @transform_4, window_bounds = array<i64: 1, 128>}, {transform_indices = @transform_5, window_bounds = array<i64: 8, 128>}]} {
    %c0 = arith.constant 0 : index
    %c0_0 = arith.constant 0 : index
    %0 = vector.load %arg1[%c0, %c0_0] : memref<8x30xbf16, #tpu.memory_space<vmem>>, vector<8x30xbf16>
    %c0_1 = arith.constant 0 : index
    %c0_2 = arith.constant 0 : index
    %1 = vector.load %arg2[%c0_1, %c0_2] : memref<30x128xbf16, #tpu.memory_space<vmem>>, vector<30x128xbf16>
    %cst = arith.constant dense<0.000000e+00> : vector<8x128xf32>
    %2 = tpu.matmul %0, %1, %cst {dimension_numbers = #tpu.dot_dimension_numbers<[1], [0], [0], [1], [0, 0, 1, 1], [], []>} : vector<8x30xbf16>, vector<30x128xbf16>, vector<8x128xf32> -> vector<8x128xf32>
    %c0_3 = arith.constant 0 : index
    %c0_4 = arith.constant 0 : index
    %3 = vector.load %arg3[%c0_3, %c0_4] : memref<1x128xf32, #tpu.memory_space<vmem>>, vector<1x128xf32>
    %4 = vector.broadcast %3 : vector<1x128xf32> to vector<8x128xf32>
    %5 = arith.addf %2, %4 : vector<8x128xf32>
    %cst_5 = arith.constant 0.000000e+00 : f32
    %6 = vector.broadcast %cst_5 : f32 to vector<8x128xf32>
    %7 = arith.maximumf %5, %6 : vector<8x128xf32>
    %8 = arith.truncf %7 : vector<8x128xf32> to vector<8x128xbf16>
    %c0_6 = arith.constant 0 : index
    %c0_7 = arith.constant 0 : index
    %9 = vector.load %arg4[%c0_6, %c0_7] : memref<128x128xbf16, #tpu.memory_space<vmem>>, vector<128x128xbf16>
    %cst_8 = arith.constant dense<0.000000e+00> : vector<8x128xf32>
    %10 = tpu.matmul %8, %9, %cst_8 {dimension_numbers = #tpu.dot_dimension_numbers<[1], [0], [0], [1], [0, 0, 1, 1], [], []>} : vector<8x128xbf16>, vector<128x128xbf16>, vector<8x128xf32> -> vector<8x128xf32>
    %c0_9 = arith.constant 0 : index
    %c0_10 = arith.constant 0 : index
    %11 = vector.load %arg5[%c0_9, %c0_10] : memref<1x128xf32, #tpu.memory_space<vmem>>, vector<1x128xf32>
    %12 = vector.broadcast %11 : vector<1x128xf32> to vector<8x128xf32>
    %13 = arith.addf %10, %12 : vector<8x128xf32>
    %c0_11 = arith.constant 0 : index
    %c0_12 = arith.constant 0 : index
    %14 = vector.load %arg6[%c0_11, %c0_12] : memref<8x128xf32, #tpu.memory_space<vmem>>, vector<8x128xf32>
    tpu.vector_store %arg6[%c0_11, %c0_12], %13 {strides = array<i32>} : memref<8x128xf32, #tpu.memory_space<vmem>>, vector<8x128xf32>,
    return
  }
  func.func @transform_0(%arg0: i32) -> (i32, i32) {
    %c0_i32 = arith.constant 0 : i32
    %c0_i32_0 = arith.constant 0 : i32
    return %arg0, %c0_i32 : i32, i32
  }
  func.func @transform_1(%arg0: i32) -> (i32, i32) {
    %c0_i32 = arith.constant 0 : i32
    %c0_i32_0 = arith.constant 0 : i32
    %c0_i32_1 = arith.constant 0 : i32
    return %c0_i32, %c0_i32_0 : i32, i32
  }
  func.func @transform_2(%arg0: i32) -> (i32, i32) {
    %c0_i32 = arith.constant 0 : i32
    %c0_i32_0 = arith.constant 0 : i32
    %c0_i32_1 = arith.constant 0 : i32
    return %c0_i32, %c0_i32_0 : i32, i32
  }
  func.func @transform_3(%arg0: i32) -> (i32, i32) {
    %c0_i32 = arith.constant 0 : i32
    %c0_i32_0 = arith.constant 0 : i32
    %c0_i32_1 = arith.constant 0 : i32
    return %c0_i32, %c0_i32_0 : i32, i32
  }
  func.func @transform_4(%arg0: i32) -> (i32, i32) {
    %c0_i32 = arith.constant 0 : i32
    %c0_i32_0 = arith.constant 0 : i32
    %c0_i32_1 = arith.constant 0 : i32
    return %c0_i32, %c0_i32_0 : i32, i32
  }
  func.func @transform_5(%arg0: i32) -> (i32, i32) {
    %c0_i32 = arith.constant 0 : i32
    %c0_i32_0 = arith.constant 0 : i32
    return %arg0, %c0_i32 : i32, i32
  }
}

</mosaic_0001>

<llo_original>
// kernel: tpu_custom_call.1
$region0: #{tpu_custom_call.1}
  #allocation0 [shape = 'u32[]', space=smem, size = 0x4, offset = 0x4, fixed_abs, tag = 'smem constant byte address 0x4 - core index']
  #allocation1 [shape = 'u32[144,128]{1,0:T(1,128)}', space=vmem, size = 0x12000, scoped, tag = 'internal scratch']
  %s0 = inlined_call_operand.hbm [shape: bf16[8,30], index: 0, kind: input, shape index: {}]
  %s1 = inlined_call_operand.hbm [shape: bf16[30,128], index: 1, kind: input, shape index: {}]
  %s2 = inlined_call_operand.vmem [shape: f32[1,128], index: 2, kind: input, shape index: {}]
  %s3 = inlined_call_operand.hbm [shape: bf16[128,128], index: 3, kind: input, shape index: {}]
  %s4 = inlined_call_operand.vmem [shape: f32[1,128], index: 4, kind: input, shape index: {}]
  %s5 = inlined_call_operand.hbm [shape: f32[8,128], index: 5, kind: output, shape index: {}]
  %s6 = sld [smem:[#allocation0]]
  $region42: #{tpu_custom_call.1} parent=0
    _
  %s8 = ssub.s32 1, %s6
  %s9 = scalar_select 0, %s8, %s6
  $region1: #{tpu_custom_call.1} parent=0
    #allocation2 [shape = 'u8[2048]{0}', space=vmem, size = 0x800, scoped, tag = 'input window, operand 0, single buffered']
    #allocation3 [shape = 's32[1]{0}', space=sflag, size = 0x4, scoped, tag = 'scoped memory for tpu_custom_call.1']
    #allocation4 [shape = 's32[1]{0}', space=sflag, size = 0x4, scoped, tag = 'scoped memory for tpu_custom_call.1']
    #allocation5 [shape = 'u8[8192]{0}', space=vmem, size = 0x2000, scoped, tag = 'input window, operand 1, single buffered']
    #allocation6 [shape = 's32[1]{0}', space=sflag, size = 0x4, scoped, tag = 'scoped memory for tpu_custom_call.1']
    #allocation7 [shape = 'u8[32768]{0}', space=vmem, size = 0x8000, scoped, tag = 'input window, operand 3, single buffered']
    #allocation8 [shape = 'u8[4096]{0}', space=vmem, size = 0x1000, scoped, tag = 'output window, operand 0, single buffered']
    %10 = vsyncpa [#allocation3], 0
    %11 = vsyncpa [#allocation6], 0
    %12 = vsyncpa [#allocation4], 0
    // Predicated region
    $region2: #{tpu_custom_call.1} parent=1 // pred_check
      _
    $region3: #{tpu_custom_call.1} parent=1 // pred_check_branch
      %14 = sbr.rel (0) target = $region5
    $region4: #{tpu_custom_call.1} parent=1 // pred_region
      %s16 = ssub.s32 64, 64
      %17 = vsyncadd [#allocation3], %s16
      %s19 = sshll.u32 [#allocation2], 4
      %s20 = int_to_ptr.vmem [resolvable:$true] %s19
      %22 = dma.hbm_to_vmem [thread:$0]  %s0, 64, %s20, [#allocation3]
    $region5: #{tpu_custom_call.1} parent=1 // pred_fallthru
      _
    // Predicated region
    $region6: #{tpu_custom_call.1} parent=1 // pred_check
      _
    $region7: #{tpu_custom_call.1} parent=1 // pred_check_branch
      %24 = sbr.rel (0) target = $region9
    $region8: #{tpu_custom_call.1} parent=1 // pred_region
      %s26 = ssub.s32 256, 256
      %27 = vsyncadd [#allocation6], %s26
      %s28 = sshll.u32 [#allocation5], 4
      %s29 = int_to_ptr.vmem [resolvable:$true] %s28
      %34 = dma.hbm_to_vmem [thread:$0]  %s1, 256, %s29, [#allocation6], 64, 64, 4
    $region9: #{tpu_custom_call.1} parent=1 // pred_fallthru
      _
    // Predicated region
    $region10: #{tpu_custom_call.1} parent=1 // pred_check
      _
    $region11: #{tpu_custom_call.1} parent=1 // pred_check_branch
      %36 = sbr.rel (0) target = $region13
    $region12: #{tpu_custom_call.1} parent=1 // pred_region
      _
    $region13: #{tpu_custom_call.1} parent=1 // pred_fallthru
      _
    // Predicated region
    $region14: #{tpu_custom_call.1} parent=1 // pred_check
      _
    $region15: #{tpu_custom_call.1} parent=1 // pred_check_branch
      %38 = sbr.rel (0) target = $region17
    $region16: #{tpu_custom_call.1} parent=1 // pred_region
      %s40 = ssub.s32 1024, 1024
      %41 = vsyncadd [#allocation6], %s40
      %s42 = sshll.u32 [#allocation7], 4
      %s43 = int_to_ptr.vmem [resolvable:$true] %s42
      %48 = dma.hbm_to_vmem [thread:$0]  %s3, 1024, %s43, [#allocation6], 64, 64, 4
    $region17: #{tpu_custom_call.1} parent=1 // pred_fallthru
      _
    // Predicated region
    $region18: #{tpu_custom_call.1} parent=1 // pred_check
      _
    $region19: #{tpu_custom_call.1} parent=1 // pred_check_branch
      %50 = sbr.rel (0) target = $region21
    $region20: #{tpu_custom_call.1} parent=1 // pred_region
      _
    $region21: #{tpu_custom_call.1} parent=1 // pred_fallthru
      _
    // Predicated region
    $region22: #{tpu_custom_call.1} parent=1 // pred_check
      _
    $region23: #{tpu_custom_call.1} parent=1 // pred_check_branch
      %52 = sbr.rel (0) target = $region25
    $region24: #{tpu_custom_call.1} parent=1 // pred_region
      %53 = dma.done [#allocation3], 64
    $region25: #{tpu_custom_call.1} parent=1 // pred_fallthru
      _
    // Predicated region
    $region26: #{tpu_custom_call.1} parent=1 // pred_check
      _
    $region27: #{tpu_custom_call.1} parent=1 // pred_check_branch
      %55 = sbr.rel (0) target = $region29
    $region28: #{tpu_custom_call.1} parent=1 // pred_region
      %56 = dma.done [#allocation6], 256
    $region29: #{tpu_custom_call.1} parent=1 // pred_fallthru
      _
    // Predicated region
    $region30: #{tpu_custom_call.1} parent=1 // pred_check
      _
    $region31: #{tpu_custom_call.1} parent=1 // pred_check_branch
      %58 = sbr.rel (0) target = $region33
    $region32: #{tpu_custom_call.1} parent=1 // pred_region
      %59 = dma.done [#allocation6], 1024
    $region33: #{tpu_custom_call.1} parent=1 // pred_fallthru
      _
    %v61 = vld [vmem:[#allocation2] sm:$0xf]
    %v62 = vld [vmem:[#allocation5] sm:$0xf]
    %v63 = vld [vmem:[#allocation5 + $0x4] sm:$0xf]
    %v64 = vld [vmem:[#allocation5 + $0x8] sm:$0xf]
    %v65 = vld [vmem:[#allocation5 + $0xc] sm:$0x7]
    %v66 = vld [vmem:[%s2] sm:$0x1]
    %v68 = vlaneseq
    %v69 = vshrl.u32 %v68, 7
    %v70 = vsub.s32 0, %v69
    %v71 = vrot.slane %v66, %v70
    %v77 = vunpack.c.l.b16 %v62
    %v78 = vunpack.c.l.b16 %v63
    %v79 = vunpack.c.l.b16 %v64
    %v80 = vunpack.c.l.b16 %v65
    %v81 = vpack.c.b16 %v78, %v77
    %v82 = vpack.c.b16 %v80, %v79
    %vm84 = vcmask 244736
    %v86 = vsel %vm84, %v61, 0
    %vm88 = vcmask 1046528
    %v90 = vsel %vm88, %v82, 0
    %92 = vmatprep.subr.bf16.mxu0 0
    %93 = vmatpush1.bf16.msra.mxu0 %v81
    %94 = vmatprep.subr.bf16.mxu0 0
    %95 = vmatpush1.bf16.msra.mxu0 %v90
    %96 = vmatprep.subr.bf16.mxu0 0
    %97 = vmatpush1.bf16.msra.mxu0 0
    %98 = vmatprep.subr.bf16.mxu0 0
    %99 = vmatpush1.bf16.msra.mxu0 0
    %100 = vmatprep.subr.bf16.mxu0 0
    %101 = vmatpush1.bf16.msra.mxu0 0
    %102 = vmatprep.subr.bf16.mxu0 0
    %103 = vmatpush1.bf16.msra.mxu0 0
    %104 = vmatprep.subr.bf16.mxu0 0
    %105 = vmatpush1.bf16.msra.mxu0 0
    %106 = vmatprep.subr.bf16.mxu0 0
    %107 = vmatpush1.bf16.msra.mxu0 0
    %108 = vmatprep.subr.bf16.mxu0 0
    %109 = vmatpush1.bf16.msra.mxu0 0
    %110 = vmatprep.subr.bf16.mxu0 0
    %111 = vmatpush1.bf16.msra.mxu0 0
    %112 = vmatprep.subr.bf16.mxu0 0
    %113 = vmatpush1.bf16.msra.mxu0 0
    %114 = vmatprep.subr.bf16.mxu0 0
    %115 = vmatpush1.bf16.msra.mxu0 0
    %116 = vmatprep.subr.bf16.mxu0 0
    %117 = vmatpush1.bf16.msra.mxu0 0
    %118 = vmatprep.subr.bf16.mxu0 0
    %119 = vmatpush1.bf16.msra.mxu0 0
    %120 = vmatprep.subr.bf16.mxu0 0
    %121 = vmatpush1.bf16.msra.mxu0 0
    %122 = vmatprep.subr.bf16.mxu0 0
    %123 = vmatpush1.bf16.msra.mxu0 0
    %124 = vmatprep.mubr.bf16.mxu0 0
    %125 = vmatmul.mubr.bf16.gmra.mrb[0].mxu0 %v86
    %v126 = vpop.f32.mrb[0].mxu0
    %v127 = vadd.f32 %v71, %v126
    %v128 = vpop.f32.mrb[0].mxu0
    %v129 = vpop.f32.mrb[0].mxu0
    %v130 = vpop.f32.mrb[0].mxu0
    %131 = vdwg.mxu0
    %v132 = vmax.f32 %v127, 0.0
    %v133 = vpack.c.bf16 %v132, %v132
    %v134 = vld [vmem:[#allocation7] sm:$0xf]
    %v135 = vld [vmem:[#allocation7 + $0x4] sm:$0xf]
    %v136 = vld [vmem:[#allocation7 + $0x8] sm:$0xf]
    %v137 = vld [vmem:[#allocation7 + $0xc] sm:$0xf]
    %v138 = vld [vmem:[#allocation7 + $0x10] sm:$0xf]
    %v139 = vld [vmem:[#allocation7 + $0x14] sm:$0xf]
    %v140 = vld [vmem:[#allocation7 + $0x18] sm:$0xf]
    %v141 = vld [vmem:[#allocation7 + $0x1c] sm:$0xf]
    %v142 = vld [vmem:[#allocation7 + $0x20] sm:$0xf]
    %v143 = vld [vmem:[#allocation7 + $0x24] sm:$0xf]
    %v144 = vld [vmem:[#allocation7 + $0x28] sm:$0xf]
    %v145 = vld [vmem:[#allocation7 + $0x2c] sm:$0xf]
    %v146 = vld [vmem:[#allocation7 + $0x30] sm:$0xf]
    %v147 = vld [vmem:[#allocation7 + $0x34] sm:$0xf]
    %v148 = vld [vmem:[#allocation7 + $0x38] sm:$0xf]
    %v149 = vld [vmem:[#allocation7 + $0x3c] sm:$0xf]
    %v150 = vld [vmem:[%s4] sm:$0x1]
    %v152 = vlaneseq
    %v153 = vshrl.u32 %v152, 7
    %v154 = vsub.s32 0, %v153
    %v155 = vrot.slane %v150, %v154
    %v173 = vunpack.c.l.b16 %v134
    %v174 = vunpack.c.l.b16 %v135
    %v175 = vunpack.c.l.b16 %v136
    %v176 = vunpack.c.l.b16 %v137
    %v177 = vunpack.c.l.b16 %v138
    %v178 = vunpack.c.l.b16 %v139
    %v179 = vunpack.c.l.b16 %v140
    %v180 = vunpack.c.l.b16 %v141
    %v181 = vunpack.c.l.b16 %v142
    %v182 = vunpack.c.l.b16 %v143
    %v183 = vunpack.c.l.b16 %v144
    %v184 = vunpack.c.l.b16 %v145
    %v185 = vunpack.c.l.b16 %v146
    %v186 = vunpack.c.l.b16 %v147
    %v187 = vunpack.c.l.b16 %v148
    %v188 = vunpack.c.l.b16 %v149
    %v189 = vpack.c.b16 %v174, %v173
    %v190 = vpack.c.b16 %v176, %v175
    %v191 = vpack.c.b16 %v178, %v177
    %v192 = vpack.c.b16 %v180, %v179
    %v193 = vpack.c.b16 %v182, %v181
    %v194 = vpack.c.b16 %v184, %v183
    %v195 = vpack.c.b16 %v186, %v185
    %v196 = vpack.c.b16 %v188, %v187
    %205 = vmatprep.subr.bf16.mxu0 0
    %206 = vmatpush1.bf16.msra.mxu0 %v189
    %207 = vmatprep.subr.bf16.mxu0 0
    %208 = vmatpush1.bf16.msra.mxu0 %v190
    %209 = vmatprep.subr.bf16.mxu0 0
    %210 = vmatpush1.bf16.msra.mxu0 %v191
    %211 = vmatprep.subr.bf16.mxu0 0
    %212 = vmatpush1.bf16.msra.mxu0 %v192
    %213 = vmatprep.subr.bf16.mxu0 0
    %214 = vmatpush1.bf16.msra.mxu0 %v193
    %215 = vmatprep.subr.bf16.mxu0 0
    %216 = vmatpush1.bf16.msra.mxu0 %v194
    %217 = vmatprep.subr.bf16.mxu0 0
    %218 = vmatpush1.bf16.msra.mxu0 %v195
    %219 = vmatprep.subr.bf16.mxu0 0
    %220 = vmatpush1.bf16.msra.mxu0 %v196
    %221 = vmatprep.subr.bf16.mxu0 0
    %222 = vmatpush1.bf16.msra.mxu0 0
    %223 = vmatprep.subr.bf16.mxu0 0
    %224 = vmatpush1.bf16.msra.mxu0 0
    %225 = vmatprep.subr.bf16.mxu0 0
    %226 = vmatpush1.bf16.msra.mxu0 0
    %227 = vmatprep.subr.bf16.mxu0 0
    %228 = vmatpush1.bf16.msra.mxu0 0
    %229 = vmatprep.subr.bf16.mxu0 0
    %230 = vmatpush1.bf16.msra.mxu0 0
    %231 = vmatprep.subr.bf16.mxu0 0
    %232 = vmatpush1.bf16.msra.mxu0 0
    %233 = vmatprep.subr.bf16.mxu0 0
    %234 = vmatpush1.bf16.msra.mxu0 0
    %235 = vmatprep.subr.bf16.mxu0 0
    %236 = vmatpush1.bf16.msra.mxu0 0
    %237 = vmatprep.mubr.bf16.mxu0 0
    %238 = vmatmul.mubr.bf16.gmra.mrb[0].mxu0 %v133
    %v239 = vpop.f32.mrb[0].mxu0
    %v240 = vadd.f32 %v155, %v239
    %v241 = vpop.f32.mrb[0].mxu0
    %v242 = vpop.f32.mrb[0].mxu0
    %v243 = vpop.f32.mrb[0].mxu0
    %244 = vdwg.mxu0
    %245 = vst [vmem:[#allocation8] sm:$0xff] %v240
    // Predicated region
    $region34: #{tpu_custom_call.1} parent=1 // pred_check
      _
    $region35: #{tpu_custom_call.1} parent=1 // pred_check_branch
      %247 = sbr.rel (0) target = $region37
    $region36: #{tpu_custom_call.1} parent=1 // pred_region
      %s249 = ssub.s32 128, 128
      %250 = vsyncadd [#allocation4], %s249
      %s252 = sshll.u32 [#allocation8], 4
      %s253 = int_to_ptr.vmem [resolvable:$true] %s252
      %255 = dma.vmem_to_hbm [thread:$0]  %s253, 128, %s5, [#allocation4]
    $region37: #{tpu_custom_call.1} parent=1 // pred_fallthru
      _
    // Predicated region
    $region38: #{tpu_custom_call.1} parent=1 // pred_check
      _
    $region39: #{tpu_custom_call.1} parent=1 // pred_check_branch
      %257 = sbr.rel (0) target = $region41
    $region40: #{tpu_custom_call.1} parent=1 // pred_region
      %258 = dma.done [#allocation4], 128
    $region41: #{tpu_custom_call.1} parent=1 // pred_fallthru
      _
    %259 = vsyncpa [#allocation3], 1
    %260 = vsyncpa [#allocation6], 1
    %261 = vsyncpa [#allocation4], 1

</llo_original>
